<compile_context>
chip_gen: v7x
topology: tpu7x:2x2x1
jax: 0.10.0
libtpu: 0.0.40
codegen_flags: <defaults>
</compile_context>

<pallas_src>
import functools
import math

import jax
import jax.numpy as jnp
import numpy as np
from jax.experimental import pallas as pl
from jax.experimental.pallas import tpu as pltpu

_TARGET_BLOCK_BYTES = 2 * 1024 * 1024  # ~2 MiB blocks: near HBM roofline, fits
                                       # v5e's 16 MiB scoped VMEM and v7x's 64 MiB.


def _vdropout_kernel(seed_ref, x_ref, o_ref, *,
                     block_rows, lane_w, chans_per_row, div_magic, thr, scale):
    """Process one lane-dense (block_rows, lane_w) tile of the flattened input."""
    i = pl.program_id(0)
    C = chans_per_row  # channels per slab row = lane_w // D

    # ---- per-CHANNEL keep decision at (block_rows, C): 1/D of the elements ----
    r = jax.lax.broadcasted_iota(jnp.int32, (block_rows, C), 0)
    j = jax.lax.broadcasted_iota(jnp.int32, (block_rows, C), 1)
    chan_id = r * C + j + i * (block_rows * C)           # absolute channel index

    seed_u = seed_ref[0].astype(jnp.uint32)              # scalar (SMEM)
    h = chan_id.astype(jnp.uint32) ^ (seed_u * jnp.uint32(0x9E3779B9))
    h = (h ^ (h >> 16)) * jnp.uint32(0x7FEB352D)         # lowbias32 mixer
    h = (h ^ (h >> 15)) * jnp.uint32(0x846CA68B)
    h = h ^ (h >> 16)
    keep01 = jnp.where(h < jnp.uint32(thr), 1.0, 0.0).astype(jnp.bfloat16)

    # ---- expand channel mask to lanes via the (idle) MXU ----------------------
    # e_mat[j, c] = 1 iff lane c belongs to channel j (c // D == j).  Built from
    # iotas once per block (~(C*W)/1024 vregs of work, negligible vs the tile).
    jj = jax.lax.broadcasted_iota(jnp.int32, (C, lane_w), 0)
    cc = jax.lax.broadcasted_iota(jnp.int32, (C, lane_w), 1)
    lane_chan = (cc * div_magic) >> 16                   # exact c // D (validated)
    e_mat = jnp.where(jj == lane_chan, 1.0, 0.0).astype(jnp.bfloat16)

    # 0/1 bf16 inputs -> exact 0.0 / 1.0 f32 result.
    mult = jnp.dot(keep01, e_mat, preferred_element_type=jnp.float32)

    # ---- apply in f32 (exact 1/keep_prob scaling), cast on store --------------
    xf = x_ref[...].astype(jnp.float32)
    o_ref[...] = (xf * (mult * jnp.float32(scale))).astype(o_ref.dtype)


def _round_up(n, m):
    return ((n + m - 1) // m) * m


def vdropout(x, drop_rate, seed, training=True):
    """Forward pass of _VDropout. Identity when not training or drop_rate == 0.

    The dropout mask depends only on (seed, channel index): vary `seed` across
    layers / training steps to get independent masks.
    """
    if not training or drop_rate == 0.0:
        return x

    keep_prob = 1.0 - float(drop_rate)
    orig_shape = x.shape
    D = int(orig_shape[-1])
    N = int(np.prod(orig_shape))
    if N == 0:
        return x
    itemsize = int(jnp.dtype(x.dtype).itemsize)

    # Lane-dense slab width: multiple of 128 (unmasked full-width stores) and
    # of D (channels never straddle slab rows).
    w_base = (128 * D) // math.gcd(128, D)               # lcm(128, D)
    W = w_base * max(1, 512 // w_base)
    C = W // D

    # Magic constant for exact "c // D" with c in [0, W): checked at trace time.
    div_magic = -((-(1 << 16)) // D)                      # ceil(2^16 / D)
    lanes = np.arange(W, dtype=np.int64)
    if not np.all((lanes * div_magic) >> 16 == lanes // D):
        # TODO(synk): unusual last-dim sizes would need a wider magic divide.
        raise NotImplementedError(f"magic divide-by-{D} not exact for width {W}")

    thr = min(int(round(keep_prob * 4294967296.0)), 4294967295)
    scale = 1.0 / keep_prob
    seed_arr = jnp.reshape(jnp.asarray(seed, dtype=jnp.int32), (1,))

    # Zero-copy fast path: the (M, W) view is a pure bitcast when W divides N,
    # so the kernel is the only HBM pass (no pad on input, no slice on output).
    if N % W == 0 and N // W >= 8:
        M = N // W
        x2 = x.reshape(M, W)
        padded = False
    else:
        # TODO(synk): this fallback pads to a whole number of slab rows, which
        # costs one extra HBM read+write pass outside the kernel; inputs whose
        # leading size is a multiple of W//D (=128 for D=3) hit the zero-copy
        # path above instead.
        M = max(8, pl.cdiv(N, W))
        Npad = M * W
        x2 = jnp.pad(x.reshape(-1), (0, Npad - N)).reshape(M, W)
        padded = True

    # Block rows: ~2 MiB input blocks, and keep >= 2 grid steps on larger inputs
    # so v7x's two TensorCores can split the (parallel) row axis.
    bm_target = max(8, (_TARGET_BLOCK_BYTES // (W * itemsize)) // 8 * 8)
    if M <= 16:
        bm = M                                            # single block, full rows
    else:
        bm = min(bm_target, _round_up(pl.cdiv(M, 2), 8))
    grid = (pl.cdiv(M, bm),)                              # last block may be partial
                                                          # (OOB rows are dropped)

    kernel = functools.partial(
        _vdropout_kernel, block_rows=bm, lane_w=W, chans_per_row=C,
        div_magic=div_magic, thr=thr, scale=scale)

    out2 = pl.pallas_call(
        kernel,
        out_shape=jax.ShapeDtypeStruct((M, W), x.dtype),
        grid_spec=pltpu.PrefetchScalarGridSpec(
            num_scalar_prefetch=1,                        # seed lives in SMEM
            grid=grid,
            in_specs=[pl.BlockSpec((bm, W), lambda i, seed: (i, 0))],
            out_specs=pl.BlockSpec((bm, W), lambda i, seed: (i, 0)),
        ),
        compiler_params=pltpu.CompilerParams(
            dimension_semantics=("parallel",),
            vmem_limit_bytes=32 * 1024 * 1024),
        cost_estimate=pl.CostEstimate(
            flops=4 * N, transcendentals=0,
            bytes_accessed=2 * N * itemsize),
    )(seed_arr, x2)

    if padded:
        return out2.reshape(-1)[:N].reshape(orig_shape)
    return out2.reshape(orig_shape)


def _check_vdropout(x, out, keep_prob):
    """Every channel row must be either entirely zeroed or entirely scaled."""
    D = x.shape[-1]
    xn = np.asarray(x).reshape(-1, D)
    on = np.asarray(out).reshape(-1, D)
    n_kept = 0
    n_drop = 0
    for r in range(xn.shape[0]):
        zero_row = np.allclose(on[r], 0.0, atol=1e-6)
        scaled_row = np.allclose(on[r], xn[r] / keep_prob, rtol=1e-5, atol=1e-6)
        assert zero_row or scaled_row, f"row {r} is neither dropped nor scaled"
        if zero_row:
            n_drop += 1
        else:
            n_kept += 1
    return n_kept, n_drop


if __name__ == "__main__":
    key = jax.random.PRNGKey(0)
    drop_rate = 0.25
    keep_prob = 1.0 - drop_rate

    vdrop = jax.jit(vdropout, static_argnames=("drop_rate", "training"))

    # Typical GVP vector-feature shape: (num_nodes, vector_channels, 3).
    # 64*16 = 1024 channels -> zero-copy lane-dense path (W = 384, M = 8).
    x = jax.random.normal(key, (64, 16, 3), dtype=jnp.float32)
    out = jax.block_until_ready(vdrop(x, drop_rate=drop_rate, seed=42, training=True))

    n_kept, n_drop = _check_vdropout(x, out, keep_prob)
    # With 1024 channels at drop_rate=0.25 both outcomes appear w.p. ~1 - 1e-100.
    assert n_kept > 0 and n_drop > 0, (n_kept, n_drop)

    # Determinism for a fixed seed.
    out_again = jax.block_until_ready(vdrop(x, drop_rate=drop_rate, seed=42, training=True))
    assert np.allclose(np.asarray(out), np.asarray(out_again))

    # Eval mode is the identity, as in the PyTorch module.
    out_eval = jax.block_until_ready(vdrop(x, drop_rate=drop_rate, seed=42, training=False))
    assert np.allclose(np.asarray(out_eval), np.asarray(x))

    # Irregular size exercising the padded fallback path.
    x_small = jax.random.normal(jax.random.PRNGKey(1), (5, 7, 3), dtype=jnp.float32)
    out_small = jax.block_until_ready(
        vdrop(x_small, drop_rate=drop_rate, seed=7, training=True))
    _check_vdropout(x_small, out_small, keep_prob)

    print("KERNEL_OK")
</pallas_src>

<mosaic_0001>
module attributes {stable_mosaic.version = 11 : i64} {
  func.func @_vdropout_kernel(%arg0: i32, %arg1: memref<1xi32, #tpu.memory_space<smem>>, %arg2: memref<8x384xf32, #tpu.memory_space<vmem>>, %arg3: memref<8x384xf32, #tpu.memory_space<vmem>>) attributes {dimension_semantics = [#tpu.dimension_semantics<parallel>], iteration_bounds = array<i64: 1>, scalar_prefetch = 1 : i64, scratch_operands = 0 : i64, tpu.core_type = #tpu.core_type<tc>, window_params = [{transform_indices = @transform_0, window_bounds = array<i64: 8, 384>}, {transform_indices = @transform_1, window_bounds = array<i64: 8, 384>}]} {
    %0 = tpu.iota {dimensions = array<i32: 0>} : vector<8x128xi32>
    %1 = tpu.iota {dimensions = array<i32: 1>} : vector<8x128xi32>
    %c128_i32 = arith.constant 128 : i32
    %2 = vector.broadcast %c128_i32 : i32 to vector<8x128xi32>
    %3 = arith.muli %0, %2 : vector<8x128xi32>
    %4 = arith.addi %3, %1 : vector<8x128xi32>
    %c1024_i32 = arith.constant 1024 : i32
    %5 = arith.muli %arg0, %c1024_i32 : i32
    %6 = vector.broadcast %5 : i32 to vector<8x128xi32>
    %7 = arith.addi %4, %6 : vector<8x128xi32>
    %c0 = arith.constant 0 : index
    %8 = memref.load %arg1[%c0] : memref<1xi32, #tpu.memory_space<smem>>
    %c-1640531527_i32 = arith.constant -1640531527 : i32
    %9 = arith.muli %8, %c-1640531527_i32 : i32
    %10 = vector.broadcast %9 : i32 to vector<8x128xi32>
    %11 = arith.xori %7, %10 : vector<8x128xi32>
    %c16_i32 = arith.constant 16 : i32
    %12 = vector.broadcast %c16_i32 : i32 to vector<8x128xi32>
    %13 = arith.shrui %11, %12 : vector<8x128xi32>
    %14 = arith.xori %11, %13 : vector<8x128xi32>
    %c2146121005_i32 = arith.constant 2146121005 : i32
    %15 = vector.broadcast %c2146121005_i32 : i32 to vector<8x128xi32>
    %16 = arith.muli %14, %15 : vector<8x128xi32>
    %c15_i32 = arith.constant 15 : i32
    %17 = vector.broadcast %c15_i32 : i32 to vector<8x128xi32>
    %18 = arith.shrui %16, %17 : vector<8x128xi32>
    %19 = arith.xori %16, %18 : vector<8x128xi32>
    %c-2073254261_i32 = arith.constant -2073254261 : i32
    %20 = vector.broadcast %c-2073254261_i32 : i32 to vector<8x128xi32>
    %21 = arith.muli %19, %20 : vector<8x128xi32>
    %c16_i32_0 = arith.constant 16 : i32
    %22 = vector.broadcast %c16_i32_0 : i32 to vector<8x128xi32>
    %23 = arith.shrui %21, %22 : vector<8x128xi32>
    %24 = arith.xori %21, %23 : vector<8x128xi32>
    %c-1073741824_i32 = arith.constant -1073741824 : i32
    %25 = vector.broadcast %c-1073741824_i32 : i32 to vector<8x128xi32>
    %26 = arith.cmpi ult, %24, %25 : vector<8x128xi32>
    %cst = arith.constant 1.000000e+00 : f32
    %cst_1 = arith.constant 0.000000e+00 : f32
    %27 = vector.broadcast %cst : f32 to vector<8x128xf32>
    %28 = vector.broadcast %cst_1 : f32 to vector<8x128xf32>
    %29 = arith.select %26, %27, %28 : vector<8x128xi1>, vector<8x128xf32>
    %30 = arith.truncf %29 : vector<8x128xf32> to vector<8x128xbf16>
    %31 = tpu.iota {dimensions = array<i32: 0>} : vector<128x384xi32>
    %32 = tpu.iota {dimensions = array<i32: 1>} : vector<128x384xi32>
    %c21846_i32 = arith.constant 21846 : i32
    %33 = vector.broadcast %c21846_i32 : i32 to vector<128x384xi32>
    %34 = arith.muli %32, %33 : vector<128x384xi32>
    %c16_i32_2 = arith.constant 16 : i32
    %35 = vector.broadcast %c16_i32_2 : i32 to vector<128x384xi32>
    %36 = arith.shrsi %34, %35 : vector<128x384xi32>
    %37 = arith.cmpi eq, %31, %36 : vector<128x384xi32>
    %cst_3 = arith.constant 1.000000e+00 : f32
    %cst_4 = arith.constant 0.000000e+00 : f32
    %38 = vector.broadcast %cst_3 : f32 to vector<128x384xf32>
    %39 = vector.broadcast %cst_4 : f32 to vector<128x384xf32>
    %40 = arith.select %37, %38, %39 : vector<128x384xi1>, vector<128x384xf32>
    %41 = arith.truncf %40 : vector<128x384xf32> to vector<128x384xbf16>
    %cst_5 = arith.constant dense<0.000000e+00> : vector<8x384xf32>
    %42 = tpu.matmul %30, %41, %cst_5 {dimension_numbers = #tpu.dot_dimension_numbers<[1], [0], [0], [1], [0, 0, 1, 1], [], []>} : vector<8x128xbf16>, vector<128x384xbf16>, vector<8x384xf32> -> vector<8x384xf32>
    %c0_6 = arith.constant 0 : index
    %c0_7 = arith.constant 0 : index
    %43 = vector.load %arg2[%c0_6, %c0_7] : memref<8x384xf32, #tpu.memory_space<vmem>>, vector<8x384xf32>
    %cst_8 = arith.constant 1.33333337 : f32
    %44 = vector.broadcast %cst_8 : f32 to vector<8x384xf32>
    %45 = arith.mulf %42, %44 : vector<8x384xf32>
    %46 = arith.mulf %43, %45 : vector<8x384xf32>
    %c0_9 = arith.constant 0 : index
    %c0_10 = arith.constant 0 : index
    %47 = vector.load %arg3[%c0_9, %c0_10] : memref<8x384xf32, #tpu.memory_space<vmem>>, vector<8x384xf32>
    tpu.vector_store %arg3[%c0_9, %c0_10], %46 {strides = array<i32>} : memref<8x384xf32, #tpu.memory_space<vmem>>, vector<8x384xf32>,
    return
  }
  func.func @transform_0(%arg0: i32, %arg1: memref<1xi32, #tpu.memory_space<smem>>) -> (i32, i32) {
    %c0_i32 = arith.constant 0 : i32
    %c0_i32_0 = arith.constant 0 : i32
    return %arg0, %c0_i32 : i32, i32
  }
  func.func @transform_1(%arg0: i32, %arg1: memref<1xi32, #tpu.memory_space<smem>>) -> (i32, i32) {
    %c0_i32 = arith.constant 0 : i32
    %c0_i32_0 = arith.constant 0 : i32
    return %arg0, %c0_i32 : i32, i32
  }
}

</mosaic_0001>

<llo_original>
// kernel: vdropout.1
$region0: #{vdropout.1}
  #allocation0 [shape = 'u32[]', space=smem, size = 0x4, offset = 0x4, fixed_abs, tag = 'smem constant byte address 0x4 - core index']
  #allocation1 [shape = 'u32[144,128]{1,0:T(1,128)}', space=vmem, size = 0x12000, scoped, tag = 'internal scratch']
  #allocation2 [shape = 's32[1]{0}', space=sflag, size = 0x4, scoped, tag = 'scoped memory for vdropout.1']
  #allocation3 [shape = 's32[1]{0:T(128)S(6)}', space=smem, size = 0x200, scoped, tag = 'prefetched SMEM operand 0']
  %s0 = inlined_call_operand.<no memory space> [shape: s32[1], index: 0, kind: input, shape index: {}]
  %s1 = inlined_call_operand.vmem [shape: f32[8,384], index: 1, kind: input, shape index: {}]
  %s2 = inlined_call_operand.vmem [shape: f32[8,384], index: 2, kind: output, shape index: {}]
  %s3 = sld [smem:[#allocation0]]
  $region14: #{vdropout.1} parent=0
    _
  %s5 = ssub.s32 1, %s3
  %s6 = scalar_select 0, %s5, %s3
  %7 = sst [smem:[#allocation3]] %s0
  // Predicated region
  $region2: #{vdropout.1} parent=0 // pred_check
    _
  $region3: #{vdropout.1} parent=0 // pred_check_branch
    %9 = sbr.rel (0) target = $region5
  $region4: #{vdropout.1} parent=0 // pred_region
    _
  $region5: #{vdropout.1} parent=0 // pred_fallthru
    _
  %v11 = vlaneseq
  %v12 = vshrl.u32 %v11, 7
  %v13 = vlaneseq
  %v14 = vand.u32 %v13, 127
  %v15 = vmul.u32 %v12, 128
  %v16 = vadd.s32 %v15, %v14
  %s17 = smul.u32 0, 1024
  %v18 = vstv %s17
  %v19 = vadd.s32 %v16, %v18
  %s20 = sld [smem:[#allocation3]]
  %s21 = smul.u32 %s20, 2654435769
  %v22 = vstv %s21
  %v23 = vxor.u32 %v19, %v22
  %v24 = vshrl.u32 %v23, 16
  %v25 = vxor.u32 %v23, %v24
  %v26 = vmul.u32 %v25, 2146121005
  %v27 = vshrl.u32 %v26, 15
  %v28 = vxor.u32 %v26, %v27
  %v29 = vmul.u32 %v28, 2221713035
  %v30 = vshrl.u32 %v29, 16
  %v31 = vxor.u32 %v29, %v30
  %vm32 = vcmp.lt.u32.totalorder %v31, 3221225472
  %v33 = vsel %vm32, 1.0, 0.0
  %v34 = vpack.c.bf16 %v33, %v33
  %v35 = vadd.s32 %v12, 8
  %v36 = vadd.s32 %v12, 16
  %v37 = vadd.s32 %v12, 24
  %v38 = vadd.s32 %v12, 32
  %v39 = vadd.s32 %v12, 40
  %v40 = vadd.s32 %v12, 48
  %v41 = vadd.s32 %v12, 56
  %v42 = vadd.s32 %v12, 64
  %v43 = vadd.s32 %v12, 72
  %v44 = vadd.s32 %v12, 80
  %v45 = vadd.s32 %v12, 88
  %v46 = vadd.s32 %v12, 96
  %v47 = vadd.s32 %v12, 104
  %v48 = vadd.s32 %v12, 112
  %v49 = vadd.s32 %v12, 120
  %v50 = vadd.s32 %v14, 128
  %v51 = vadd.s32 %v14, 256
  %v52 = vmul.u32 %v14, 21846
  %v53 = vmul.u32 %v50, 21846
  %v54 = vmul.u32 %v51, 21846
  %v55 = vshra.s32 %v52, 16
  %v56 = vshra.s32 %v53, 16
  %v57 = vshra.s32 %v54, 16
  %vm58 = vcmp.eq.s32.totalorder %v12, %v55
  %vm59 = vcmp.eq.s32.totalorder %v12, %v56
  %vm60 = vcmp.eq.s32.totalorder %v12, %v57
  %vm61 = vcmp.eq.s32.totalorder %v35, %v55
  %vm62 = vcmp.eq.s32.totalorder %v35, %v56
  %vm63 = vcmp.eq.s32.totalorder %v35, %v57
  %vm64 = vcmp.eq.s32.totalorder %v36, %v55
  %vm65 = vcmp.eq.s32.totalorder %v36, %v56
  %vm66 = vcmp.eq.s32.totalorder %v36, %v57
  %vm67 = vcmp.eq.s32.totalorder %v37, %v55
  %vm68 = vcmp.eq.s32.totalorder %v37, %v56
  %vm69 = vcmp.eq.s32.totalorder %v37, %v57
  %vm70 = vcmp.eq.s32.totalorder %v38, %v55
  %vm71 = vcmp.eq.s32.totalorder %v38, %v56
  %vm72 = vcmp.eq.s32.totalorder %v38, %v57
  %vm73 = vcmp.eq.s32.totalorder %v39, %v55
  %vm74 = vcmp.eq.s32.totalorder %v39, %v56
  %vm75 = vcmp.eq.s32.totalorder %v39, %v57
  %vm76 = vcmp.eq.s32.totalorder %v40, %v55
  %vm77 = vcmp.eq.s32.totalorder %v40, %v56
  %vm78 = vcmp.eq.s32.totalorder %v40, %v57
  %vm79 = vcmp.eq.s32.totalorder %v41, %v55
  %vm80 = vcmp.eq.s32.totalorder %v41, %v56
  %vm81 = vcmp.eq.s32.totalorder %v41, %v57
  %vm82 = vcmp.eq.s32.totalorder %v42, %v55
  %vm83 = vcmp.eq.s32.totalorder %v42, %v56
  %vm84 = vcmp.eq.s32.totalorder %v42, %v57
  %vm85 = vcmp.eq.s32.totalorder %v43, %v55
  %vm86 = vcmp.eq.s32.totalorder %v43, %v56
  %vm87 = vcmp.eq.s32.totalorder %v43, %v57
  %vm88 = vcmp.eq.s32.totalorder %v44, %v55
  %vm89 = vcmp.eq.s32.totalorder %v44, %v56
  %vm90 = vcmp.eq.s32.totalorder %v44, %v57
  %vm91 = vcmp.eq.s32.totalorder %v45, %v55
  %vm92 = vcmp.eq.s32.totalorder %v45, %v56
  %vm93 = vcmp.eq.s32.totalorder %v45, %v57
  %vm94 = vcmp.eq.s32.totalorder %v46, %v55
  %vm95 = vcmp.eq.s32.totalorder %v46, %v56
  %vm96 = vcmp.eq.s32.totalorder %v46, %v57
  %vm97 = vcmp.eq.s32.totalorder %v47, %v55
  %vm98 = vcmp.eq.s32.totalorder %v47, %v56
  %vm99 = vcmp.eq.s32.totalorder %v47, %v57
  %vm100 = vcmp.eq.s32.totalorder %v48, %v55
  %vm101 = vcmp.eq.s32.totalorder %v48, %v56
  %vm102 = vcmp.eq.s32.totalorder %v48, %v57
  %vm103 = vcmp.eq.s32.totalorder %v49, %v55
  %vm104 = vcmp.eq.s32.totalorder %v49, %v56
  %vm105 = vcmp.eq.s32.totalorder %v49, %v57
  %v106 = vsel %vm58, 1.0, 0.0
  %v107 = vsel %vm59, 1.0, 0.0
  %v108 = vsel %vm60, 1.0, 0.0
  %v109 = vsel %vm61, 1.0, 0.0
  %v110 = vsel %vm62, 1.0, 0.0
  %v111 = vsel %vm63, 1.0, 0.0
  %v112 = vsel %vm64, 1.0, 0.0
  %v113 = vsel %vm65, 1.0, 0.0
  %v114 = vsel %vm66, 1.0, 0.0
  %v115 = vsel %vm67, 1.0, 0.0
  %v116 = vsel %vm68, 1.0, 0.0
  %v117 = vsel %vm69, 1.0, 0.0
  %v118 = vsel %vm70, 1.0, 0.0
  %v119 = vsel %vm71, 1.0, 0.0
  %v120 = vsel %vm72, 1.0, 0.0
  %v121 = vsel %vm73, 1.0, 0.0
  %v122 = vsel %vm74, 1.0, 0.0
  %v123 = vsel %vm75, 1.0, 0.0
  %v124 = vsel %vm76, 1.0, 0.0
  %v125 = vsel %vm77, 1.0, 0.0
  %v126 = vsel %vm78, 1.0, 0.0
  %v127 = vsel %vm79, 1.0, 0.0
  %v128 = vsel %vm80, 1.0, 0.0
  %v129 = vsel %vm81, 1.0, 0.0
  %v130 = vsel %vm82, 1.0, 0.0
  %v131 = vsel %vm83, 1.0, 0.0
  %v132 = vsel %vm84, 1.0, 0.0
  %v133 = vsel %vm85, 1.0, 0.0
  %v134 = vsel %vm86, 1.0, 0.0
  %v135 = vsel %vm87, 1.0, 0.0
  %v136 = vsel %vm88, 1.0, 0.0
  %v137 = vsel %vm89, 1.0, 0.0
  %v138 = vsel %vm90, 1.0, 0.0
  %v139 = vsel %vm91, 1.0, 0.0
  %v140 = vsel %vm92, 1.0, 0.0
  %v141 = vsel %vm93, 1.0, 0.0
  %v142 = vsel %vm94, 1.0, 0.0
  %v143 = vsel %vm95, 1.0, 0.0
  %v144 = vsel %vm96, 1.0, 0.0
  %v145 = vsel %vm97, 1.0, 0.0
  %v146 = vsel %vm98, 1.0, 0.0
  %v147 = vsel %vm99, 1.0, 0.0
  %v148 = vsel %vm100, 1.0, 0.0
  %v149 = vsel %vm101, 1.0, 0.0
  %v150 = vsel %vm102, 1.0, 0.0
  %v151 = vsel %vm103, 1.0, 0.0
  %v152 = vsel %vm104, 1.0, 0.0
  %v153 = vsel %vm105, 1.0, 0.0
  %v154 = vpack.c.bf16 %v109, %v106
  %v155 = vpack.c.bf16 %v110, %v107
  %v156 = vpack.c.bf16 %v111, %v108
  %v157 = vpack.c.bf16 %v115, %v112
  %v158 = vpack.c.bf16 %v116, %v113
  %v159 = vpack.c.bf16 %v117, %v114
  %v160 = vpack.c.bf16 %v121, %v118
  %v161 = vpack.c.bf16 %v122, %v119
  %v162 = vpack.c.bf16 %v123, %v120
  %v163 = vpack.c.bf16 %v127, %v124
  %v164 = vpack.c.bf16 %v128, %v125
  %v165 = vpack.c.bf16 %v129, %v126
  %v166 = vpack.c.bf16 %v133, %v130
  %v167 = vpack.c.bf16 %v134, %v131
  %v168 = vpack.c.bf16 %v135, %v132
  %v169 = vpack.c.bf16 %v139, %v136
  %v170 = vpack.c.bf16 %v140, %v137
  %v171 = vpack.c.bf16 %v141, %v138
  %v172 = vpack.c.bf16 %v145, %v142
  %v173 = vpack.c.bf16 %v146, %v143
  %v174 = vpack.c.bf16 %v147, %v144
  %v175 = vpack.c.bf16 %v151, %v148
  %v176 = vpack.c.bf16 %v152, %v149
  %v177 = vpack.c.bf16 %v153, %v150
  %178 = vmatprep.subr.bf16.mxu0 %v155
  %179 = vmatpush1.bf16.msra.mxu0 %v154
  %180 = vmatprep.subr.bf16.mxu0 %v158
  %181 = vmatpush1.bf16.msra.mxu0 %v157
  %182 = vmatprep.subr.bf16.mxu0 %v161
  %183 = vmatpush1.bf16.msra.mxu0 %v160
  %184 = vmatprep.subr.bf16.mxu0 %v164
  %185 = vmatpush1.bf16.msra.mxu0 %v163
  %186 = vmatprep.subr.bf16.mxu0 %v167
  %187 = vmatpush1.bf16.msra.mxu0 %v166
  %188 = vmatprep.subr.bf16.mxu0 %v170
  %189 = vmatpush1.bf16.msra.mxu0 %v169
  %190 = vmatprep.subr.bf16.mxu0 %v173
  %191 = vmatpush1.bf16.msra.mxu0 %v172
  %192 = vmatprep.subr.bf16.mxu0 %v176
  %193 = vmatpush1.bf16.msra.mxu0 %v175
  %194 = vmatprep.subr.bf16.mxu0 0
  %195 = vmatpush1.bf16.msra.mxu0 0
  %196 = vmatprep.subr.bf16.mxu0 0
  %197 = vmatpush1.bf16.msra.mxu0 0
  %198 = vmatprep.subr.bf16.mxu0 0
  %199 = vmatpush1.bf16.msra.mxu0 0
  %200 = vmatprep.subr.bf16.mxu0 0
  %201 = vmatpush1.bf16.msra.mxu0 0
  %202 = vmatprep.subr.bf16.mxu0 0
  %203 = vmatpush1.bf16.msra.mxu0 0
  %204 = vmatprep.subr.bf16.mxu0 0
  %205 = vmatpush1.bf16.msra.mxu0 0
  %206 = vmatprep.subr.bf16.mxu0 0
  %207 = vmatpush1.bf16.msra.mxu0 0
  %208 = vmatprep.subr.bf16.mxu0 0
  %209 = vmatpush1.bf16.msra.mxu0 0
  %210 = vmatprep.mubr.bf16.mxu0 0
  %211 = vmatmul.mubr.bf16.gmra.mrb[0].mxu0 %v34
  %v212 = vpop.f32.mrb[0].mxu0
  %v213 = vadd.f32 0.0, %v212
  %v214 = vpop.f32.mrb[0].mxu0
  %v215 = vadd.f32 0.0, %v214
  %v216 = vpop.f32.mrb[0].mxu0
  %v217 = vpop.f32.mrb[0].mxu0
  %218 = vdwg.mxu0
  %219 = vmatprep.subr.bf16.mxu0 0
  %220 = vmatpush1.bf16.msra.mxu0 %v156
  %221 = vmatprep.subr.bf16.mxu0 0
  %222 = vmatpush1.bf16.msra.mxu0 %v159
  %223 = vmatprep.subr.bf16.mxu0 0
  %224 = vmatpush1.bf16.msra.mxu0 %v162
  %225 = vmatprep.subr.bf16.mxu0 0
  %226 = vmatpush1.bf16.msra.mxu0 %v165
  %227 = vmatprep.subr.bf16.mxu0 0
  %228 = vmatpush1.bf16.msra.mxu0 %v168
  %229 = vmatprep.subr.bf16.mxu0 0
  %230 = vmatpush1.bf16.msra.mxu0 %v171
  %231 = vmatprep.subr.bf16.mxu0 0
  %232 = vmatpush1.bf16.msra.mxu0 %v174
  %233 = vmatprep.subr.bf16.mxu0 0
  %234 = vmatpush1.bf16.msra.mxu0 %v177
  %235 = vmatprep.subr.bf16.mxu0 0
  %236 = vmatpush1.bf16.msra.mxu0 0
  %237 = vmatprep.subr.bf16.mxu0 0
  %238 = vmatpush1.bf16.msra.mxu0 0
  %239 = vmatprep.subr.bf16.mxu0 0
  %240 = vmatpush1.bf16.msra.mxu0 0
  %241 = vmatprep.subr.bf16.mxu0 0
  %242 = vmatpush1.bf16.msra.mxu0 0
  %243 = vmatprep.subr.bf16.mxu0 0
  %244 = vmatpush1.bf16.msra.mxu0 0
  %245 = vmatprep.subr.bf16.mxu0 0
  %246 = vmatpush1.bf16.msra.mxu0 0
  %247 = vmatprep.subr.bf16.mxu0 0
  %248 = vmatpush1.bf16.msra.mxu0 0
  %249 = vmatprep.subr.bf16.mxu0 0
  %250 = vmatpush1.bf16.msra.mxu0 0
  %251 = vmatprep.mubr.bf16.mxu0 0
  %252 = vmatmul.mubr.bf16.gmra.mrb[0].mxu0 %v34
  %v253 = vpop.f32.mrb[0].mxu0
  %v254 = vadd.f32 0.0, %v253
  %v255 = vpop.f32.mrb[0].mxu0
  %v256 = vpop.f32.mrb[0].mxu0
  %v257 = vpop.f32.mrb[0].mxu0
  %258 = vdwg.mxu0
  %v259 = vld [vmem:[%s1] sm:$0xff]
  %v260 = vld [vmem:[%s1 + $0x8] sm:$0xff]
  %v261 = vld [vmem:[%s1 + $0x10] sm:$0xff]
  %v262 = vmul.f32 %v213, 1.3333334
  %v263 = vmul.f32 %v215, 1.3333334
  %v264 = vmul.f32 %v254, 1.3333334
  %v265 = vmul.f32 %v259, %v262
  %v266 = vmul.f32 %v260, %v263
  %v267 = vmul.f32 %v261, %v264
  %268 = vst [vmem:[%s2] sm:$0xff] %v265
  %269 = vst [vmem:[%s2 + $0x8] sm:$0xff] %v266
  %270 = vst [vmem:[%s2 + $0x10] sm:$0xff] %v267
  // Predicated region
  $region6: #{vdropout.1} parent=0 // pred_check
    _
  $region7: #{vdropout.1} parent=0 // pred_check_branch
    %272 = sbr.rel (0) target = $region9
  $region8: #{vdropout.1} parent=0 // pred_region
    _
  $region9: #{vdropout.1} parent=0 // pred_fallthru
    _
  // Predicated region
  $region10: #{vdropout.1} parent=0 // pred_check
    _
  $region11: #{vdropout.1} parent=0 // pred_check_branch
    %274 = sbr.rel (0) target = $region13
  $region12: #{vdropout.1} parent=0 // pred_region
    _
  $region13: #{vdropout.1} parent=0 // pred_fallthru
    _

</llo_original>
